<compile_context>
chip_gen: v6e
topology: v6e:2x2x1
jax: 0.10.0
libtpu: 0.0.40
codegen_flags: <defaults>
</compile_context>

<pallas_src>
import functools

import jax
import jax.numpy as jnp
from jax.experimental import pallas as pl
from jax.experimental.pallas import tpu as pltpu


def _w2v_gather_kernel(ids_ref, w_hbm, o_ref, sem):
    # ids_ref: (Np,) int32 token ids, resident in SMEM (scalar prefetch)
    # w_hbm:   (V, E) float32 embedding table, left in HBM
    # o_ref:   (tile, E) output VMEM block for this grid step
    # sem:     (1,) DMA semaphore shared by this tile's row copies
    tile = o_ref.shape[0]
    base = pl.program_id(0) * tile

    @pl.loop(0, tile)
    def _start(t):
        tok = ids_ref[base + t]
        pltpu.make_async_copy(w_hbm.at[tok], o_ref.at[t], sem.at[0]).start()

    @pl.loop(0, tile)
    def _wait(t):
        # Same-shaped descriptor as each started copy; one wait per row.
        pltpu.make_async_copy(w_hbm.at[0], o_ref.at[t], sem.at[0]).wait()


def _round_up(x, m):
    return (x + m - 1) // m * m


@functools.partial(jax.jit, static_argnames=("token_tile",))
def word2vec_encode(text_vec, weight, *, token_tile=256):
    """Pallas equivalent of Word2VecEncoder.forward: weight[text_vec]."""
    B, S = text_vec.shape
    V, E = weight.shape
    N = B * S

    # TODO(synk): nn.Embedding raises on out-of-range ids; we clamp instead so
    # the HBM row DMA stays in-bounds (silent semantic difference for bad ids).
    ids = jnp.clip(text_vec.reshape(N).astype(jnp.int32), 0, V - 1)

    # Tokens handled per grid step.  Must be a multiple of 8 (sublane) when it
    # does not cover the whole (padded) token axis.
    tile = _round_up(min(token_tile, _round_up(N, 8)), 8)
    Np = _round_up(N, tile)
    if Np != N:
        ids = jnp.pad(ids, (0, Np - N))

    out = pl.pallas_call(
        _w2v_gather_kernel,
        out_shape=jax.ShapeDtypeStruct((Np, E), weight.dtype),
        grid_spec=pltpu.PrefetchScalarGridSpec(
            num_scalar_prefetch=1,                         # ids -> SMEM once
            grid=(Np // tile,),
            in_specs=[pl.BlockSpec(memory_space=pl.ANY)],  # table stays in HBM
            out_specs=pl.BlockSpec((tile, E), lambda i, ids: (i, 0)),
            scratch_shapes=[pltpu.SemaphoreType.DMA((1,))],
        ),
        compiler_params=pltpu.CompilerParams(
            dimension_semantics=("arbitrary",),
        ),
    )(ids, weight)

    return out[:N].reshape(B, S, E)


def init_word2vec_weight(key, vocab_len, emb_size):
    # nn.init.xavier_normal_ on a (vocab_len, emb_size) weight:
    # std = sqrt(2 / (fan_in + fan_out))
    std = (2.0 / (vocab_len + emb_size)) ** 0.5
    return std * jax.random.normal(key, (vocab_len, emb_size), dtype=jnp.float32)


if __name__ == "__main__":
    # Small shapes consistent with the module: vocab=64, emb=32, batch=2, seq=8.
    vocab_len, emb_size = 64, 32
    B, S = 2, 8

    key = jax.random.PRNGKey(0)
    k_w, k_ids = jax.random.split(key)

    weight = init_word2vec_weight(k_w, vocab_len, emb_size)
    text_vec = jax.random.randint(k_ids, (B, S), 0, vocab_len, dtype=jnp.int32)

    emb = word2vec_encode(text_vec, weight)
    emb = jax.block_until_ready(emb)

    # Reference: plain embedding gather.
    ref = weight[text_vec]
    assert emb.shape == (B, S, emb_size)
    assert jnp.allclose(emb, ref, atol=1e-6), "mismatch vs. reference gather"

    print("KERNEL_OK")
</pallas_src>

<mosaic_0001>
module attributes {stable_mosaic.version = 11 : i64} {
  func.func @_w2v_gather_kernel(%arg0: i32, %arg1: memref<16xi32, #tpu.memory_space<smem>>, %arg2: memref<64x32xf32, #tpu.memory_space<any>>, %arg3: memref<16x32xf32, #tpu.memory_space<vmem>>, %arg4: memref<1x!tpu.dma_semaphore, #tpu.memory_space<semaphore_mem>>) attributes {dimension_semantics = [#tpu.dimension_semantics<arbitrary>], iteration_bounds = array<i64: 1>, scalar_prefetch = 1 : i64, scratch_operands = 1 : i64, tpu.core_type = #tpu.core_type<tc>, window_params = [{}, {transform_indices = @transform_1, window_bounds = array<i64: 16, 32>}]} {
    %c16_i32 = arith.constant 16 : i32
    %0 = arith.muli %arg0, %c16_i32 : i32
    %c0_i32 = arith.constant 0 : i32
    %c16_i32_0 = arith.constant 16 : i32
    %1 = arith.addi %c0_i32, %c16_i32_0 : i32
    %c1_i32 = arith.constant 1 : i32
    scf.for %arg5 = %c0_i32 to %1 step %c1_i32  : i32 {
      %c1_i32_6 = arith.constant 1 : i32
      %3 = arith.muli %arg5, %c1_i32_6 : i32
      %c0_i32_7 = arith.constant 0 : i32
      %4 = arith.addi %c0_i32_7, %3 : i32
      %5 = arith.addi %0, %4 : i32
      %6 = arith.index_cast %5 : i32 to index
      %7 = memref.load %arg1[%6] : memref<16xi32, #tpu.memory_space<smem>>
      %c0_i32_8 = arith.constant 0 : i32
      %c0_i32_9 = arith.constant 0 : i32
      %8 = tpu.memref_slice %arg2[%7, %c0_i32_9] : memref<64x32xf32, #tpu.memory_space<any>> -> memref<1x32xf32, #tpu.memory_space<any>>
      %9 = tpu.memref_squeeze %8 : memref<1x32xf32, #tpu.memory_space<any>> -> memref<32xf32, #tpu.memory_space<any>>
      %c0_i32_10 = arith.constant 0 : i32
      %10 = tpu.memref_slice %arg3[%4, %c0_i32_10] : memref<16x32xf32, #tpu.memory_space<vmem>> -> memref<1x32xf32, #tpu.memory_space<vmem>>
      %11 = tpu.memref_squeeze %10 : memref<1x32xf32, #tpu.memory_space<vmem>> -> memref<32xf32, #tpu.memory_space<vmem>>
      %12 = tpu.memref_slice %arg4[%c0_i32_8] : memref<1x!tpu.dma_semaphore, #tpu.memory_space<semaphore_mem>> -> memref<1x!tpu.dma_semaphore, #tpu.memory_space<semaphore_mem>>
      %13 = tpu.memref_squeeze %12 : memref<1x!tpu.dma_semaphore, #tpu.memory_space<semaphore_mem>> -> memref<!tpu.dma_semaphore, #tpu.memory_space<semaphore_mem>>
      tpu.enqueue_dma source(%9 : memref<32xf32, #tpu.memory_space<any>>) target(%11 : memref<32xf32, #tpu.memory_space<vmem>>) target_semaphore(%13 : memref<!tpu.dma_semaphore, #tpu.memory_space<semaphore_mem>>)
    }
    %c16_i32_1 = arith.constant 16 : i32
    %c0_i32_2 = arith.constant 0 : i32
    %c16_i32_3 = arith.constant 16 : i32
    %2 = arith.addi %c0_i32_2, %c16_i32_3 : i32
    %c1_i32_4 = arith.constant 1 : i32
    scf.for %arg5 = %c0_i32_2 to %2 step %c1_i32_4  : i32 {
      %c1_i32_6 = arith.constant 1 : i32
      %3 = arith.muli %arg5, %c1_i32_6 : i32
      %c0_i32_7 = arith.constant 0 : i32
      %4 = arith.addi %c0_i32_7, %3 : i32
      %c0_i32_8 = arith.constant 0 : i32
      %c0_i32_9 = arith.constant 0 : i32
      %c0_i32_10 = arith.constant 0 : i32
      %5 = tpu.memref_slice %arg2[%c0_i32_8, %c0_i32_10] : memref<64x32xf32, #tpu.memory_space<any>> -> memref<1x32xf32, #tpu.memory_space<any>>
      %6 = tpu.memref_squeeze %5 : memref<1x32xf32, #tpu.memory_space<any>> -> memref<32xf32, #tpu.memory_space<any>>
      %c0_i32_11 = arith.constant 0 : i32
      %7 = tpu.memref_slice %arg3[%4, %c0_i32_11] : memref<16x32xf32, #tpu.memory_space<vmem>> -> memref<1x32xf32, #tpu.memory_space<vmem>>
      %8 = tpu.memref_squeeze %7 : memref<1x32xf32, #tpu.memory_space<vmem>> -> memref<32xf32, #tpu.memory_space<vmem>>
      %9 = tpu.memref_slice %arg4[%c0_i32_9] : memref<1x!tpu.dma_semaphore, #tpu.memory_space<semaphore_mem>> -> memref<1x!tpu.dma_semaphore, #tpu.memory_space<semaphore_mem>>
      %10 = tpu.memref_squeeze %9 : memref<1x!tpu.dma_semaphore, #tpu.memory_space<semaphore_mem>> -> memref<!tpu.dma_semaphore, #tpu.memory_space<semaphore_mem>>
      tpu.wait_dma2 semaphore(%10 : memref<!tpu.dma_semaphore, #tpu.memory_space<semaphore_mem>>) src(%6 : memref<32xf32, #tpu.memory_space<any>>) dst(%8 : memref<32xf32, #tpu.memory_space<vmem>>)
    }
    %c16_i32_5 = arith.constant 16 : i32
    return
  }
  func.func @transform_1(%arg0: i32, %arg1: memref<16xi32, #tpu.memory_space<smem>>) -> (i32, i32) {
    %c0_i32 = arith.constant 0 : i32
    %c0_i32_0 = arith.constant 0 : i32
    return %arg0, %c0_i32 : i32, i32
  }
}

</mosaic_0001>

<llo_original>
// kernel: word2vec_encode.1
$region0: #{word2vec_encode.1}
  #allocation0 [shape = 'u32[]', space=smem, size = 0x4, offset = 0x4, fixed_abs, tag = 'smem constant byte address 0x4 - core index']
  #allocation1 [shape = 'u32[144,128]{1,0:T(1,128)}', space=vmem, size = 0x12000, scoped, tag = 'internal scratch']
  #allocation2 [shape = 's32[1]{0}', space=sflag, size = 0x4, scoped, tag = 'scratch operand']
  #allocation3 [shape = 's32[1]{0}', space=sflag, size = 0x4, scoped, tag = 'scoped memory for word2vec_encode.1']
  #allocation4 [shape = 'u8[512]{0}', space=smem, size = 0x200, scoped, tag = 'prefetched SMEM operand 0']
  #allocation7 [shape = 's32[]', space=sflag, size = 0x4, offset = 0, fixed_abs, tag = 'sflag constant byte address 0x0 - dummy sync flag']
  %s0 = inlined_call_operand.vmem [shape: s32[16], index: 0, kind: input, shape index: {}]
  %s1 = inlined_call_operand.vmem [shape: f32[64,32], index: 1, kind: input, shape index: {}]
  %s2 = inlined_call_operand.hbm [shape: f32[16,32], index: 2, kind: output, shape index: {}]
  %s3 = sld [smem:[#allocation0]]
  $region54: #{word2vec_encode.1} parent=0
    _
  %s5 = ssub.s32 1, %s3
  %s6 = scalar_select 0, %s5, %s3
  %s7 = sshll.u32 %s0, 4
  %s8 = int_to_ptr.vmem [resolvable:$true] %s7
  %10 = dma.vmem_to_smem %s8, 16, [#allocation4], [#allocation3]
  %11 = dma.done [#allocation3], 16
  %12 = sfence
  $region1: #{word2vec_encode.1} parent=0
    #allocation5 [shape = 'u8[8192]{0}', space=vmem, size = 0x2000, scoped, tag = 'output window, operand 0, single buffered']
    #allocation6 [shape = 's32[1]{0}', space=sflag, size = 0x4, scoped, tag = 'scoped memory for word2vec_encode.1']
    %13 = vsyncpa [#allocation6], 0
    %s14 = smul.u32 0, 16
    loop: start=0, step=1, limit=16
    $region2: #{word2vec_encode.1} parent=1 // loop_pre_header
      _
    $region3: #{word2vec_encode.1} parent=1 // loop_header
      %s16 = sphi 0, %s20
      %p17 = scmp.ge.s32.totalorder %s16, 16
    $region4: #{word2vec_encode.1} parent=1 // loop_header_branch
      %19 = sbr.rel (%p17) target = $region8
    $region5: #{word2vec_encode.1} parent=1 // loop_body
      %s21 = sadd.s32 %s14, %s16
      %s22 = sld [smem:[#allocation4 + %s21]]
      %s23 = scalar_lea.vmem %s1, %s22
      %s24 = scalar_lea.vmem [#allocation5], %s16
      %p26 = scmp.lt.u32.totalorder 1, 8
      %p27 = pneg %p26
      // Predicated region
      $region9: #{word2vec_encode.1} parent=5 // pred_check
        _
      $region10: #{word2vec_encode.1} parent=5 // pred_check_branch
        %29 = sbr.rel (%p26) target = $region12
      $region11: #{word2vec_encode.1} parent=5 // pred_region
        %s45 = sand.u32 1, 7
        %p46 = scmp.eq.s32.totalorder %s45, 0
        %p47 = pneg %p46
        // Predicated region
        $region24: #{word2vec_encode.1} parent=11 // pred_check
          _
        $region25: #{word2vec_encode.1} parent=11 // pred_check_branch
          %49 = sbr.rel (%p46) target = $region27
        $region26: #{word2vec_encode.1} parent=11 // pred_region
          %s50 = sand.u32 1, 7
          %s51 = ssub.s32 1, %s50
          %s52 = scalar_lea.vmem %s23, %s51
          %s53 = ssub.s32 1, %s50
          %s54 = scalar_lea.vmem %s24, %s53 [#allocation5]
          %s55 = sshll.u32 1, %s50
          %s56 = ssub.s32 %s55, 1
          loop: start=0, step=1, limit=1
          $region28: #{word2vec_encode.1} parent=26 // loop_pre_header
            _
          $region29: #{word2vec_encode.1} parent=26 // loop_header
            %s58 = sphi 0, %s62
            %p59 = scmp.ge.s32.totalorder %s58, 1
            %s63 = sphi %s52, %s52
            %s64 = sphi %s54, %s54
          $region30: #{word2vec_encode.1} parent=26 // loop_header_branch
            %61 = sbr.rel (%p59) target = $region34
          $region31: #{word2vec_encode.1} parent=26 // loop_body
            %v65 = vld [vmem:[%s63] sm:%s56]
            %66 = vst [vmem:[%s64] sm:%s56] %v65
          $region32: #{word2vec_encode.1} parent=26 // loop_footer
            %s62 = sadd.s32 1, %s58
          $region33: #{word2vec_encode.1} parent=26 // loop_footer_branch
            %57 = sbr.rel target = $region29
          $region34: #{word2vec_encode.1} parent=26 // loop_exit
            _
        $region27: #{word2vec_encode.1} parent=11 // pred_fallthru
          _
      $region12: #{word2vec_encode.1} parent=5 // pred_fallthru
        _
      // Predicated region
      $region13: #{word2vec_encode.1} parent=5 // pred_check
        %p30 = pneg %p26
      $region14: #{word2vec_encode.1} parent=5 // pred_check_branch
        %32 = sbr.rel (%p30) target = $region16
      $region15: #{word2vec_encode.1} parent=5 // pred_region
        %s33 = sshll.u32 1, 1
        %s34 = ssub.s32 %s33, 1
        loop: start=0, step=1, limit=1
        $region17: #{word2vec_encode.1} parent=15 // loop_pre_header
          _
        $region18: #{word2vec_encode.1} parent=15 // loop_header
          %s36 = sphi 0, %s40
          %p37 = scmp.ge.s32.totalorder %s36, 1
          %s41 = sphi %s23, %s23
          %s42 = sphi %s24, %s24
        $region19: #{word2vec_encode.1} parent=15 // loop_header_branch
          %39 = sbr.rel (%p37) target = $region23
        $region20: #{word2vec_encode.1} parent=15 // loop_body
          %v43 = vld [vmem:[%s41] sm:%s34]
          %44 = vst [vmem:[%s42] sm:%s34] %v43
        $region21: #{word2vec_encode.1} parent=15 // loop_footer
          %s40 = sadd.s32 1, %s36
        $region22: #{word2vec_encode.1} parent=15 // loop_footer_branch
          %35 = sbr.rel target = $region18
        $region23: #{word2vec_encode.1} parent=15 // loop_exit
          _
      $region16: #{word2vec_encode.1} parent=5 // pred_fallthru
        _
      // Predicated region
      $region35: #{word2vec_encode.1} parent=5 // pred_check
        _
      $region36: #{word2vec_encode.1} parent=5 // pred_check_branch
        %69 = sbr.rel (0) target = $region38
      $region37: #{word2vec_encode.1} parent=5 // pred_region
        %70 = vsyncadd [#allocation2], 16
      $region38: #{word2vec_encode.1} parent=5 // pred_fallthru
        _
    $region6: #{word2vec_encode.1} parent=1 // loop_footer
      %s20 = sadd.s32 1, %s16
    $region7: #{word2vec_encode.1} parent=1 // loop_footer_branch
      %15 = sbr.rel target = $region3
    $region8: #{word2vec_encode.1} parent=1 // loop_exit
      _
    loop: start=0, step=1, limit=16
    $region39: #{word2vec_encode.1} parent=1 // loop_pre_header
      _
    $region40: #{word2vec_encode.1} parent=1 // loop_header
      %s72 = sphi 0, %s76
      %p73 = scmp.ge.s32.totalorder %s72, 16
    $region41: #{word2vec_encode.1} parent=1 // loop_header_branch
      %75 = sbr.rel (%p73) target = $region45
    $region42: #{word2vec_encode.1} parent=1 // loop_body
      %78 = dma.done [#allocation2], 16
    $region43: #{word2vec_encode.1} parent=1 // loop_footer
      %s76 = sadd.s32 1, %s72
    $region44: #{word2vec_encode.1} parent=1 // loop_footer_branch
      %71 = sbr.rel target = $region40
    $region45: #{word2vec_encode.1} parent=1 // loop_exit
      _
    // Predicated region
    $region46: #{word2vec_encode.1} parent=1 // pred_check
      _
    $region47: #{word2vec_encode.1} parent=1 // pred_check_branch
      %80 = sbr.rel (0) target = $region49
    $region48: #{word2vec_encode.1} parent=1 // pred_region
      %s82 = ssub.s32 256, 256
      %83 = vsyncadd [#allocation6], %s82
      %s84 = sshll.u32 [#allocation5], 4
      %s85 = int_to_ptr.vmem [resolvable:$true] %s84
      %90 = dma.vmem_to_hbm [thread:$0]  %s85, 256, %s2, [#allocation6], 128, 128, 8
    $region49: #{word2vec_encode.1} parent=1 // pred_fallthru
      _
    // Predicated region
    $region50: #{word2vec_encode.1} parent=1 // pred_check
      _
    $region51: #{word2vec_encode.1} parent=1 // pred_check_branch
      %92 = sbr.rel (0) target = $region53
    $region52: #{word2vec_encode.1} parent=1 // pred_region
      %93 = dma.done [#allocation6], 256
    $region53: #{word2vec_encode.1} parent=1 // pred_fallthru
      _
    %94 = vsyncpa [#allocation6], 1
  %95 = vsyncmov [#allocation2]
  %s96 = vpop.sfrf %95
  %p97 = scmp.eq.s32.totalorder %s96, 0
  %p98 = pneg %p97
  %100 = shalt.err (%p98)

</llo_original>
